<compile_context>
chip_gen: v5e
topology: v5e:2x2
jax: 0.10.0
libtpu: 0.0.40
codegen_flags: <defaults>
</compile_context>

<pallas_src>
import functools
import math

import jax
import jax.numpy as jnp
import numpy as np
from jax.experimental import pallas as pl
from jax.experimental.pallas import tpu as pltpu


_VMEM_FOOTPRINT_BUDGET = 40 * 1024 * 1024   # target tile footprint (safe on every generation)
_VMEM_LIMIT_CAP = 56 * 1024 * 1024          # never request more (v7x physical VMEM = 64 MiB)


def _round_up(v, m):
    return -(-v // m) * m


def _pick_tm(M, fixed_bytes, per_row_bytes, requested):
    """Row-tile size: as large as the VMEM budget allows, but keep >=2 row tiles
    whenever possible so v7x's two TensorCores share the parallel row axis."""
    if requested is not None:
        return max(8, (requested // 8) * 8)
    half_m = max(8, _round_up(-(-M // 2), 8))          # ceil(M/2), multiple of 8
    avail = _VMEM_FOOTPRINT_BUDGET - fixed_bytes
    tm_budget = max(8, (avail // per_row_bytes) // 8 * 8) if avail > 0 else 8
    return int(min(1024, half_m, tm_budget))


# ---------------------------------------------------------------------------
# Kernels
# ---------------------------------------------------------------------------

def _fused_kernel(x_ref, w_ref, b_ref, o_ref):
    """out = x + (x @ W_eff + b_eff); multiplier already folded into W_eff/b_eff."""
    y = jnp.dot(x_ref[...], w_ref[...], preferred_element_type=jnp.float32)
    y = y + b_ref[...].astype(jnp.float32)
    o_ref[...] = (x_ref[...].astype(jnp.float32) + y).astype(o_ref.dtype)


def _fused_kernel_ntiled(x_ref, xres_ref, w_ref, b_ref, o_ref):
    """N-tiled fused variant: x_ref is the full (tm, dim) row (matmul operand,
    resident across the n axis); xres_ref is the (tm, tn) residual slice."""
    y = jnp.dot(x_ref[...], w_ref[...], preferred_element_type=jnp.float32)
    y = y + b_ref[...].astype(jnp.float32)
    o_ref[...] = (xres_ref[...].astype(jnp.float32) + y).astype(o_ref.dtype)


def _streaming_kernel(x_ref, w1_ref, w2_ref, b_ref, o_ref, *acc, multiplier):
    """Two-matmul form; hidden axis streamed over grid axis 1.

    b_ref holds the fused bias (b1 @ W2 + b2).  When no scratch ref is passed
    the (resident, f32) output block itself is the accumulator."""
    acc_ref = acc[0] if acc else o_ref
    j = pl.program_id(1)

    @pl.when(j == 0)
    def _():
        acc_ref[...] = jnp.zeros_like(acc_ref)

    # Native-dtype MXU operands, f32 accumulation.
    h = jnp.dot(x_ref[...], w1_ref[...], preferred_element_type=jnp.float32)
    acc_ref[...] += jnp.dot(h.astype(w2_ref.dtype), w2_ref[...],
                            preferred_element_type=jnp.float32)

    @pl.when(j == pl.num_programs(1) - 1)
    def _():
        y = acc_ref[...] + b_ref[...].astype(jnp.float32)
        o_ref[...] = (x_ref[...].astype(jnp.float32)
                      + y * jnp.float32(multiplier)).astype(o_ref.dtype)


# ---------------------------------------------------------------------------
# Wrappers
# ---------------------------------------------------------------------------

def _fused_forward(x2d, w1, b1, w2, b2, multiplier, M, dim, isz, w_isz, tm, tn):
    f32 = jnp.float32
    hi = jax.lax.Precision.HIGHEST
    # One-time (per weight update) collapse of the two linears, multiplier folded in.
    w_eff = (jnp.dot(w1.astype(f32), w2.astype(f32), precision=hi)
             * f32(multiplier)).astype(w1.dtype)
    b_eff = ((jnp.dot(b1.astype(f32)[None, :], w2.astype(f32), precision=hi)[0]
              + b2.astype(f32)) * f32(multiplier)).reshape(1, dim)

    # Column (N) tile of W_eff: full width when it fits (stays VMEM resident
    # across all row tiles), otherwise a 128-multiple slice.
    if tn is None:
        tn = dim
        if dim % 128 == 0 and 2 * dim * dim * w_isz > _VMEM_FOOTPRINT_BUDGET // 2:
            tn = 128
            for cand in (2048, 1024, 512, 256, 128):
                if dim % cand == 0 and 2 * dim * cand * w_isz <= _VMEM_FOOTPRINT_BUDGET // 2:
                    tn = cand
                    break
    assert dim % tn == 0
    grid_n = dim // tn
    ntiled = grid_n > 1

    fixed = 2 * dim * tn * w_isz + 2 * tn * 4                       # weight tile + bias
    per_row = 2 * dim * isz + 2 * tn * isz + (2 * tn * isz if ntiled else 0)
    tm = _pick_tm(M, fixed, per_row, tm)
    grid_m = -(-M // tm)
    m_pad = grid_m * tm
    if m_pad != M:
        x2d = jnp.pad(x2d, ((0, m_pad - M), (0, 0)))

    footprint = fixed + per_row * tm
    vmem_limit = int(max(32 * 1024 * 1024,
                         min(footprint + 12 * 1024 * 1024, _VMEM_LIMIT_CAP)))

    weight_reads = grid_m if ntiled else 1        # resident weights are read once
    cost = pl.CostEstimate(
        flops=2 * m_pad * dim * dim,
        transcendentals=0,
        bytes_accessed=int(m_pad * dim * isz * (2 if ntiled else 1)
                           + weight_reads * dim * dim * w_isz
                           + dim * 4
                           + m_pad * dim * isz),
    )

    if not ntiled:
        out2d = pl.pallas_call(
            _fused_kernel,
            out_shape=jax.ShapeDtypeStruct((m_pad, dim), x2d.dtype),
            grid_spec=pltpu.PrefetchScalarGridSpec(
                num_scalar_prefetch=0,
                grid=(grid_m,),
                in_specs=[
                    pl.BlockSpec((tm, dim), lambda i: (i, 0)),    # x row tile
                    pl.BlockSpec((dim, dim), lambda i: (0, 0)),   # W_eff (resident)
                    pl.BlockSpec((1, dim), lambda i: (0, 0)),     # b_eff
                ],
                out_specs=pl.BlockSpec((tm, dim), lambda i: (i, 0)),
                scratch_shapes=[],
            ),
            compiler_params=pltpu.CompilerParams(
                dimension_semantics=("parallel",),
                vmem_limit_bytes=vmem_limit,
            ),
            cost_estimate=cost,
        )(x2d, w_eff, b_eff)
    else:
        out2d = pl.pallas_call(
            _fused_kernel_ntiled,
            out_shape=jax.ShapeDtypeStruct((m_pad, dim), x2d.dtype),
            grid_spec=pltpu.PrefetchScalarGridSpec(
                num_scalar_prefetch=0,
                grid=(grid_m, grid_n),
                in_specs=[
                    pl.BlockSpec((tm, dim), lambda i, n: (i, 0)),   # full x row (resident over n)
                    pl.BlockSpec((tm, tn), lambda i, n: (i, n)),    # residual slice
                    pl.BlockSpec((dim, tn), lambda i, n: (0, n)),   # W_eff column tile
                    pl.BlockSpec((1, tn), lambda i, n: (0, n)),     # b_eff tile
                ],
                out_specs=pl.BlockSpec((tm, tn), lambda i, n: (i, n)),
                scratch_shapes=[],
            ),
            compiler_params=pltpu.CompilerParams(
                dimension_semantics=("parallel", "parallel"),
                vmem_limit_bytes=vmem_limit,
            ),
            cost_estimate=cost,
        )(x2d, x2d, w_eff, b_eff)

    return out2d[:M] if m_pad != M else out2d


def _streaming_forward(x2d, w1, b1, w2, b2, multiplier, M, dim, hidden,
                       isz, w_isz, f32_out, tm, th):
    f32 = jnp.float32
    hi = jax.lax.Precision.HIGHEST
    # Fold b1 into the second-layer bias: b_fused = b1 @ W2 + b2 (review item #2).
    b_fused = (jnp.dot(b1.astype(f32)[None, :], w2.astype(f32), precision=hi)[0]
               + b2.astype(f32)).reshape(1, dim)

    # Hidden tile: full width when weights fit, else a multiple of 256 (MXU fill
    # on v6e/v7x), falling back to 128.
    if th is None:
        th = hidden
        if 4 * dim * hidden * w_isz > _VMEM_FOOTPRINT_BUDGET // 2:
            for cand in (512, 256, 128):
                if hidden % cand == 0:
                    th = cand
                    break
    assert hidden % th == 0
    grid_h = hidden // th

    fixed = 2 * (dim * th + th * dim) * w_isz + 2 * dim * 4
    per_row = 2 * dim * isz + 2 * dim * isz + (0 if f32_out else dim * 4)
    tm = _pick_tm(M, fixed, per_row, tm)
    grid_m = -(-M // tm)
    m_pad = grid_m * tm
    if m_pad != M:
        x2d = jnp.pad(x2d, ((0, m_pad - M), (0, 0)))

    footprint = fixed + per_row * tm
    vmem_limit = int(max(32 * 1024 * 1024,
                         min(footprint + 12 * 1024 * 1024, _VMEM_LIMIT_CAP)))

    cost = pl.CostEstimate(
        flops=4 * m_pad * dim * hidden,
        transcendentals=0,
        bytes_accessed=int(m_pad * dim * isz
                           + grid_m * (w1.size + w2.size) * w_isz   # re-streamed per row tile
                           + dim * 4
                           + m_pad * dim * isz),
    )

    kernel = functools.partial(_streaming_kernel, multiplier=float(multiplier))
    scratch = [] if f32_out else [pltpu.VMEM((tm, dim), jnp.float32)]

    out2d = pl.pallas_call(
        kernel,
        out_shape=jax.ShapeDtypeStruct((m_pad, dim), x2d.dtype),
        grid_spec=pltpu.PrefetchScalarGridSpec(
            num_scalar_prefetch=0,
            grid=(grid_m, grid_h),
            in_specs=[
                pl.BlockSpec((tm, dim), lambda i, j: (i, 0)),    # x row (resident over j)
                pl.BlockSpec((dim, th), lambda i, j: (0, j)),    # W1 hidden slice
                pl.BlockSpec((th, dim), lambda i, j: (j, 0)),    # W2 hidden slice
                pl.BlockSpec((1, dim), lambda i, j: (0, 0)),     # fused bias
            ],
            out_specs=pl.BlockSpec((tm, dim), lambda i, j: (i, 0)),
            scratch_shapes=scratch,
        ),
        compiler_params=pltpu.CompilerParams(
            dimension_semantics=("parallel", "arbitrary"),
            vmem_limit_bytes=vmem_limit,
        ),
        cost_estimate=cost,
    )(x2d, w1, w2, b_fused)

    return out2d[:M] if m_pad != M else out2d


def hyper_logic(x, w1, b1, w2, b2, *, multiplier=1.0, fuse_linears=True,
                tm=None, tn=None, th=None):
    """HyperLogic forward:  x + ((x @ w1 + b1) @ w2 + b2) * multiplier.

    x  : (..., dim)
    w1 : (dim, 2*dim)   (transposed vs torch Linear weight)
    b1 : (2*dim,)
    w2 : (2*dim, dim)   (transposed vs torch Linear weight)
    b2 : (dim,)

    fuse_linears=True collapses the two linears into one precomputed dim x dim
    matmul (best when weights are reused across many forwards, i.e. inference);
    fuse_linears=False keeps the streaming two-matmul kernel.
    """
    *lead, dim = x.shape
    hidden = w1.shape[1]
    assert w1.shape == (dim, hidden) and w2.shape == (hidden, dim)
    assert b1.shape == (hidden,) and b2.shape == (dim,)

    M = int(np.prod(lead)) if lead else 1
    x2d = x.reshape(M, dim)
    isz = x.dtype.itemsize
    w_isz = w1.dtype.itemsize
    f32_out = x.dtype == jnp.float32

    if fuse_linears:
        out2d = _fused_forward(x2d, w1, b1, w2, b2, multiplier,
                               M, dim, isz, w_isz, tm, tn)
    else:
        out2d = _streaming_forward(x2d, w1, b1, w2, b2, multiplier,
                                   M, dim, hidden, isz, w_isz, f32_out, tm, th)
    return out2d.reshape(*lead, dim)


if __name__ == "__main__":
    key = jax.random.PRNGKey(0)
    batch, seq, dim = 2, 8, 32
    hidden = 2 * dim

    kx, kw1, kb1, kw2, kb2 = jax.random.split(key, 5)
    x = jax.random.normal(kx, (batch, seq, dim), dtype=jnp.float32)

    # Deterministic Linear(dim, 2*dim) / Linear(2*dim, dim) parameters.
    bound1 = 1.0 / math.sqrt(dim)
    w1 = jax.random.uniform(kw1, (dim, hidden), jnp.float32, -bound1, bound1)
    b1 = jax.random.uniform(kb1, (hidden,), jnp.float32, -bound1, bound1)
    bound2 = 1.0 / math.sqrt(hidden)
    w2 = jax.random.uniform(kw2, (hidden, dim), jnp.float32, -bound2, bound2)
    b2 = jax.random.uniform(kb2, (dim,), jnp.float32, -bound2, bound2)

    mult = 1.0  # HyperLogic.logic_multiplier

    out_fused = jax.block_until_ready(
        hyper_logic(x, w1, b1, w2, b2, multiplier=mult, fuse_linears=True))
    out_stream = jax.block_until_ready(
        hyper_logic(x, w1, b1, w2, b2, multiplier=mult, fuse_linears=False))

    # Reference in float64 on host (exact beyond input quantization).  Tolerance
    # covers TPU MXU default matmul precision (bf16-rounded f32 operands) and the
    # different-but-equivalent association order of the fused weights.
    xn = np.asarray(x, np.float64)
    w1n, b1n = np.asarray(w1, np.float64), np.asarray(b1, np.float64)
    w2n, b2n = np.asarray(w2, np.float64), np.asarray(b2, np.float64)
    ref = xn + ((xn @ w1n + b1n) @ w2n + b2n) * mult

    assert out_fused.shape == (batch, seq, dim)
    assert out_stream.shape == (batch, seq, dim)
    assert np.allclose(np.asarray(out_fused, np.float64), ref, atol=3e-2, rtol=3e-2), \
        "fused kernel mismatch vs reference"
    assert np.allclose(np.asarray(out_stream, np.float64), ref, atol=3e-2, rtol=3e-2), \
        "streaming kernel mismatch vs reference"

    print("KERNEL_OK")
</pallas_src>

<mosaic_0001>
module attributes {stable_mosaic.version = 11 : i64} {
  func.func @_fused_kernel(%arg0: i32, %arg1: memref<8x32xf32, #tpu.memory_space<vmem>>, %arg2: memref<32x32xf32, #tpu.memory_space<vmem>>, %arg3: memref<1x32xf32, #tpu.memory_space<vmem>>, %arg4: memref<8x32xf32, #tpu.memory_space<vmem>>) attributes {dimension_semantics = [#tpu.dimension_semantics<parallel>], iteration_bounds = array<i64: 2>, scalar_prefetch = 0 : i64, scratch_operands = 0 : i64, tpu.core_type = #tpu.core_type<tc>, window_params = [{transform_indices = @transform_0, window_bounds = array<i64: 8, 32>}, {pipeline_mode = #tpu.pipeline_mode<synchronous>, transform_indices = @transform_1, window_bounds = array<i64: 32, 32>}, {pipeline_mode = #tpu.pipeline_mode<synchronous>, transform_indices = @transform_2, window_bounds = array<i64: 1, 32>}, {transform_indices = @transform_3, window_bounds = array<i64: 8, 32>}]} {
    %c0 = arith.constant 0 : index
    %c0_0 = arith.constant 0 : index
    %0 = vector.load %arg1[%c0, %c0_0] : memref<8x32xf32, #tpu.memory_space<vmem>>, vector<8x32xf32>
    %c0_1 = arith.constant 0 : index
    %c0_2 = arith.constant 0 : index
    %1 = vector.load %arg2[%c0_1, %c0_2] : memref<32x32xf32, #tpu.memory_space<vmem>>, vector<32x32xf32>
    %cst = arith.constant dense<0.000000e+00> : vector<8x32xf32>
    %2 = tpu.matmul %0, %1, %cst {dimension_numbers = #tpu.dot_dimension_numbers<[1], [0], [0], [1], [0, 0, 1, 1], [], []>} : vector<8x32xf32>, vector<32x32xf32>, vector<8x32xf32> -> vector<8x32xf32>
    %c0_3 = arith.constant 0 : index
    %c0_4 = arith.constant 0 : index
    %3 = vector.load %arg3[%c0_3, %c0_4] : memref<1x32xf32, #tpu.memory_space<vmem>>, vector<1x32xf32>
    %4 = vector.broadcast %3 : vector<1x32xf32> to vector<8x32xf32>
    %5 = arith.addf %2, %4 : vector<8x32xf32>
    %c0_5 = arith.constant 0 : index
    %c0_6 = arith.constant 0 : index
    %6 = vector.load %arg1[%c0_5, %c0_6] : memref<8x32xf32, #tpu.memory_space<vmem>>, vector<8x32xf32>
    %7 = arith.addf %6, %5 : vector<8x32xf32>
    %c0_7 = arith.constant 0 : index
    %c0_8 = arith.constant 0 : index
    %8 = vector.load %arg4[%c0_7, %c0_8] : memref<8x32xf32, #tpu.memory_space<vmem>>, vector<8x32xf32>
    tpu.vector_store %arg4[%c0_7, %c0_8], %7 {strides = array<i32>} : memref<8x32xf32, #tpu.memory_space<vmem>>, vector<8x32xf32>,
    return
  }
  func.func @transform_0(%arg0: i32) -> (i32, i32) {
    %c0_i32 = arith.constant 0 : i32
    %c0_i32_0 = arith.constant 0 : i32
    return %arg0, %c0_i32 : i32, i32
  }
  func.func @transform_1(%arg0: i32) -> (i32, i32) {
    %c0_i32 = arith.constant 0 : i32
    %c0_i32_0 = arith.constant 0 : i32
    %c0_i32_1 = arith.constant 0 : i32
    return %c0_i32, %c0_i32_0 : i32, i32
  }
  func.func @transform_2(%arg0: i32) -> (i32, i32) {
    %c0_i32 = arith.constant 0 : i32
    %c0_i32_0 = arith.constant 0 : i32
    %c0_i32_1 = arith.constant 0 : i32
    return %c0_i32, %c0_i32_0 : i32, i32
  }
  func.func @transform_3(%arg0: i32) -> (i32, i32) {
    %c0_i32 = arith.constant 0 : i32
    %c0_i32_0 = arith.constant 0 : i32
    return %arg0, %c0_i32 : i32, i32
  }
}

</mosaic_0001>

<llo_original>
// kernel: tpu_custom_call.1
$region0: #{tpu_custom_call.1}
  #allocation0 [shape = 'u32[]', space=smem, size = 0x4, offset = 0x4, fixed_abs, tag = 'smem constant byte address 0x4 - core index']
  #allocation1 [shape = 'u32[72,128]{1,0:T(1,128)}', space=vmem, size = 0x9000, scoped, tag = 'internal scratch']
  %s0 = inlined_call_operand.hbm [shape: f32[16,32], index: 0, kind: input, shape index: {}]
  %s1 = inlined_call_operand.hbm [shape: f32[32,32], index: 1, kind: input, shape index: {}]
  %s2 = inlined_call_operand.vmem [shape: f32[1,32], index: 2, kind: input, shape index: {}]
  %s3 = inlined_call_operand.hbm [shape: f32[16,32], index: 3, kind: output, shape index: {}]
  %s4 = sld [smem:[#allocation0]]
  $region53: #{tpu_custom_call.1} parent=0
    _
  %s6 = ssub.s32 1, %s4
  %s7 = scalar_select 0, %s6, %s4
  $region1: #{tpu_custom_call.1} parent=0
    #allocation2 [shape = 'u8[8192]{0}', space=vmem, size = 0x2000, scoped, tag = 'input window, operand 0']
    #allocation3 [shape = 's32[2]{0}', space=sflag, size = 0x8, scoped, tag = 'scoped memory for tpu_custom_call.1']
    #allocation4 [shape = 's32[2]{0}', space=sflag, size = 0x8, scoped, tag = 'scoped memory for tpu_custom_call.1']
    #allocation5 [shape = 'u8[16384]{0}', space=vmem, size = 0x4000, scoped, tag = 'input window, operand 1, single buffered']
    #allocation6 [shape = 's32[1]{0}', space=sflag, size = 0x4, scoped, tag = 'scoped memory for tpu_custom_call.1']
    #allocation7 [shape = 'u8[8192]{0}', space=vmem, size = 0x2000, scoped, tag = 'output window, operand 0']
    %8 = vsyncpa [#allocation3], 0
    %s9 = scalar_lea.sflag [#allocation3], 1
    %10 = vsyncpa %s9, 0
    %11 = vsyncpa [#allocation6], 0
    %12 = vsyncpa [#allocation4], 0
    %s13 = scalar_lea.sflag [#allocation4], 1
    %14 = vsyncpa %s13, 0
    loop: start=0, step=1, limit=4
    $region2: #{tpu_custom_call.1} parent=1 // loop_pre_header
      _
    $region3: #{tpu_custom_call.1} parent=1 // loop_header
      %s16 = sphi 0, %s20
      %p17 = scmp.ge.s32.totalorder %s16, 4
      %s26 = sphi 0, %s28
      %s29 = sphi 0, %s26
      %s30 = sphi 0, %s29
      %s46 = sphi 0, %s30
      %s50 = sphi 0, %s50
      %s52 = sphi 0, %s50
      %s53 = sphi 0, %s52
      %s67 = sphi 0, %s53
      %s71 = sphi 0, %s71
      %s73 = sphi 0, %s71
      %s74 = sphi 0, %s73
      %s88 = sphi 0, %s74
      %s94 = sphi 0, %s96
      %s97 = sphi 0, %s94
      %s98 = sphi 0, %s97
      %s114 = sphi 0, %s98
    $region4: #{tpu_custom_call.1} parent=1 // loop_header_branch
      %19 = sbr.rel (%p17) target = $region8
    $region5: #{tpu_custom_call.1} parent=1 // loop_body
      %s21 = ssub.s32 %s16, 1
      %s22 = ssub.s32 %s16, 2
      %s23 = sadd.s32 %s16, 1
      %s24 = ssub.s32 %s16, %s23
      %p25 = scmp.eq.s32.totalorder %s24, 0
      %s27 = sadd.s32 %s26, 1
      %s28 = scalar_select %p25, %s26, %s27
      %p31 = pneg %p25
      %p32 = scmp.eq.s32.totalorder %s16, 1
      %p33 = por %p31, %p32
      %p34 = scmp.ne.s32.totalorder %s26, %s29
      %p35 = scmp.eq.s32.totalorder %s16, 0
      %p36 = por %p34, %p35
      %p37 = scmp.ne.s32.totalorder %s26, %s29
      %p38 = scmp.eq.s32.totalorder %s21, 1
      %p39 = por %p37, %p38
      %p40 = scmp.ne.s32.totalorder %s29, %s30
      %p41 = scmp.eq.s32.totalorder %s21, 0
      %p42 = por %p40, %p41
      %p43 = scmp.ne.s32.totalorder %s29, %s30
      %p44 = scmp.eq.s32.totalorder %s22, 1
      %p45 = por %p43, %p44
      %p47 = scmp.ne.s32.totalorder %s30, %s46
      %p48 = scmp.eq.s32.totalorder %s22, 0
      %p49 = por %p47, %p48
      %s51 = sadd.s32 %s50, 1
      %p54 = scmp.eq.s32.totalorder %s16, 1
      %p55 = scmp.ne.s32.totalorder %s50, %s52
      %p56 = scmp.eq.s32.totalorder %s16, 0
      %p57 = por %p55, %p56
      %p58 = scmp.ne.s32.totalorder %s50, %s52
      %p59 = scmp.eq.s32.totalorder %s21, 1
      %p60 = por %p58, %p59
      %p61 = scmp.ne.s32.totalorder %s52, %s53
      %p62 = scmp.eq.s32.totalorder %s21, 0
      %p63 = por %p61, %p62
      %p64 = scmp.ne.s32.totalorder %s52, %s53
      %p65 = scmp.eq.s32.totalorder %s22, 1
      %p66 = por %p64, %p65
      %p68 = scmp.ne.s32.totalorder %s53, %s67
      %p69 = scmp.eq.s32.totalorder %s22, 0
      %p70 = por %p68, %p69
      %s72 = sadd.s32 %s71, 1
      %p75 = scmp.eq.s32.totalorder %s16, 1
      %p76 = scmp.ne.s32.totalorder %s71, %s73
      %p77 = scmp.eq.s32.totalorder %s16, 0
      %p78 = por %p76, %p77
      %p79 = scmp.ne.s32.totalorder %s71, %s73
      %p80 = scmp.eq.s32.totalorder %s21, 1
      %p81 = por %p79, %p80
      %p82 = scmp.ne.s32.totalorder %s73, %s74
      %p83 = scmp.eq.s32.totalorder %s21, 0
      %p84 = por %p82, %p83
      %p85 = scmp.ne.s32.totalorder %s73, %s74
      %p86 = scmp.eq.s32.totalorder %s22, 1
      %p87 = por %p85, %p86
      %p89 = scmp.ne.s32.totalorder %s74, %s88
      %p90 = scmp.eq.s32.totalorder %s22, 0
      %p91 = por %p89, %p90
      %s92 = ssub.s32 %s16, %s23
      %p93 = scmp.eq.s32.totalorder %s92, 0
      %s95 = sadd.s32 %s94, 1
      %s96 = scalar_select %p93, %s94, %s95
      %p99 = pneg %p93
      %p100 = scmp.eq.s32.totalorder %s16, 1
      %p101 = por %p99, %p100
      %p102 = scmp.ne.s32.totalorder %s94, %s97
      %p103 = scmp.eq.s32.totalorder %s16, 0
      %p104 = por %p102, %p103
      %p105 = scmp.ne.s32.totalorder %s94, %s97
      %p106 = scmp.eq.s32.totalorder %s21, 1
      %p107 = por %p105, %p106
      %p108 = scmp.ne.s32.totalorder %s97, %s98
      %p109 = scmp.eq.s32.totalorder %s21, 0
      %p110 = por %p108, %p109
      %p111 = scmp.ne.s32.totalorder %s97, %s98
      %p112 = scmp.eq.s32.totalorder %s22, 1
      %p113 = por %p111, %p112
      %p115 = scmp.ne.s32.totalorder %s98, %s114
      %p116 = scmp.eq.s32.totalorder %s22, 0
      %p117 = por %p115, %p116
      %p118 = scmp.le.s32.totalorder 1, %s16
      %p119 = scmp.lt.s32.totalorder %s16, 3
      %p120 = pnand %p118, %p119
      %p121 = pneg %p120
      // Predicated region
      $region9: #{tpu_custom_call.1} parent=5 // pred_check
        _
      $region10: #{tpu_custom_call.1} parent=5 // pred_check_branch
        %123 = sbr.rel (%p120) target = $region12
      $region11: #{tpu_custom_call.1} parent=5 // pred_region
        %s124 = ssub.s32 %s16, 1
        // Predicated region
        $region13: #{tpu_custom_call.1} parent=11 // pred_check
          %p125 = pneg %p63
        $region14: #{tpu_custom_call.1} parent=11 // pred_check_branch
          %127 = sbr.rel (%p125) target = $region16
        $region15: #{tpu_custom_call.1} parent=11 // pred_region
          %129 = vsyncadd [#allocation6], 0
          %s130 = sshll.u32 %s1, 4
          %s131 = int_to_ptr.hbm [resolvable:$true] %s130
          %s132 = sshll.u32 [#allocation5], 4
          %s133 = int_to_ptr.vmem [resolvable:$true] %s132
          %138 = dma.hbm_to_vmem [thread:$0]  %s131, 512, %s133, [#allocation6], 128, 128, 8
        $region16: #{tpu_custom_call.1} parent=11 // pred_fallthru
          _
        // Predicated region
        $region17: #{tpu_custom_call.1} parent=11 // pred_check
          %p139 = pneg %p84
        $region18: #{tpu_custom_call.1} parent=11 // pred_check_branch
          %141 = sbr.rel (%p139) target = $region20
        $region19: #{tpu_custom_call.1} parent=11 // pred_region
          _
        $region20: #{tpu_custom_call.1} parent=11 // pred_fallthru
          _
      $region12: #{tpu_custom_call.1} parent=5 // pred_fallthru
        _
      %p142 = scmp.lt.s32.totalorder %s16, 2
      // Predicated region
      $region21: #{tpu_custom_call.1} parent=5 // pred_check
        %p143 = pneg %p142
      $region22: #{tpu_custom_call.1} parent=5 // pred_check_branch
        %145 = sbr.rel (%p143) target = $region24
      $region23: #{tpu_custom_call.1} parent=5 // pred_region
        // Predicated region
        $region25: #{tpu_custom_call.1} parent=23 // pred_check
          %p146 = pneg %p36
        $region26: #{tpu_custom_call.1} parent=23 // pred_check_branch
          %148 = sbr.rel (%p146) target = $region28
        $region27: #{tpu_custom_call.1} parent=23 // pred_region
          %s149 = sand.u32 %s26, 1
          %s150 = scalar_lea.sflag [#allocation3], %s149
          %s151 = sand.u32 %s26, 1
          %s152 = smul.addr %s151, 8
          %s153 = scalar_lea.vmem [#allocation2], %s152
          %155 = vsyncadd %s150, 0
          %s156 = smul.addr %s16, 8
          %s157 = scalar_lea.hbm %s0, %s156
          %s159 = sshll.u32 %s157, 4
          %s160 = int_to_ptr.hbm [resolvable:$true] %s159
          %s161 = sshll.u32 %s153, 4
          %s162 = int_to_ptr.vmem [resolvable:$true] %s161
          %164 = dma.hbm_to_vmem [thread:$0]  %s160, 128, %s162, %s150
        $region28: #{tpu_custom_call.1} parent=23 // pred_fallthru
          _
      $region24: #{tpu_custom_call.1} parent=5 // pred_fallthru
        _
      %p165 = scmp.le.s32.totalorder 1, %s16
      %p166 = scmp.lt.s32.totalorder %s16, 3
      %p167 = pnand %p165, %p166
      %p168 = pneg %p167
      // Predicated region
      $region29: #{tpu_custom_call.1} parent=5 // pred_check
        _
      $region30: #{tpu_custom_call.1} parent=5 // pred_check_branch
        %170 = sbr.rel (%p167) target = $region32
      $region31: #{tpu_custom_call.1} parent=5 // pred_region
        %s171 = ssub.s32 %s16, 1
        %s172 = sand.u32 %s29, 1
        %s173 = scalar_lea.sflag [#allocation3], %s172
        %s174 = sand.u32 %s29, 1
        %s175 = smul.addr %s174, 8
        %s176 = scalar_lea.vmem [#allocation2], %s175
        // Predicated region
        $region33: #{tpu_custom_call.1} parent=31 // pred_check
          %p177 = pneg %p42
        $region34: #{tpu_custom_call.1} parent=31 // pred_check_branch
          %179 = sbr.rel (%p177) target = $region36
        $region35: #{tpu_custom_call.1} parent=31 // pred_region
          %181 = dma.done %s173, 128
        $region36: #{tpu_custom_call.1} parent=31 // pred_fallthru
          _
        // Predicated region
        $region37: #{tpu_custom_call.1} parent=31 // pred_check
          %p182 = pneg %p63
        $region38: #{tpu_custom_call.1} parent=31 // pred_check_branch
          %184 = sbr.rel (%p182) target = $region40
        $region39: #{tpu_custom_call.1} parent=31 // pred_region
          %186 = dma.done [#allocation6], 512
        $region40: #{tpu_custom_call.1} parent=31 // pred_fallthru
          _
        %s187 = sand.u32 %s29, 1
        %s188 = scalar_lea.sflag [#allocation3], %s187
        %s189 = sand.u32 %s29, 1
        %s190 = smul.addr %s189, 8
        %s191 = scalar_lea.vmem [#allocation2], %s190
        %p192 = pneg %p42
        %p193 = pneg %p39
        %p194 = pneg %p63
        %p195 = pneg %p60
        %p196 = pneg %p84
        %p197 = pneg %p81
        %p198 = pneg %p110
        %p199 = pneg %p107
        %s200 = sand.u32 %s97, 1
        %s201 = scalar_lea.sflag [#allocation4], %s200
        %s202 = sand.u32 %s97, 1
        %s203 = smul.addr %s202, 8
        %s204 = scalar_lea.vmem [#allocation7], %s203
        %v205 = vld [vmem:[%s176] sm:$0xff]
        %v206 = vld [vmem:[#allocation5] sm:$0xff]
        %v207 = vld [vmem:[#allocation5 + $0x8] sm:$0xff]
        %v208 = vld [vmem:[#allocation5 + $0x10] sm:$0xff]
        %v209 = vld [vmem:[#allocation5 + $0x18] sm:$0xff]
        %v210 = vld [vmem:[%s2] sm:$0x1]
        %v212 = vperm.slane %v210, 0
        %vm214 = vcmask 261120
        %v216 = vsel %vm214, %v205, 0
        %218 = vmatpush.msra.mxu0 0.0
        %219 = vmatpush.msra.mxu0 0.0
        %220 = vmatpush.msra.mxu0 0.0
        %221 = vmatpush.msra.mxu0 0.0
        %222 = vmatpush.msra.mxu0 0.0
        %223 = vmatpush.msra.mxu0 0.0
        %224 = vmatpush.msra.mxu0 0.0
        %225 = vmatpush.msra.mxu0 0.0
        %226 = vmatpush.msra.mxu0 0.0
        %227 = vmatpush.msra.mxu0 0.0
        %228 = vmatpush.msra.mxu0 0.0
        %229 = vmatpush.msra.mxu0 0.0
        %230 = vmatpush.msra.mxu0 %v209
        %231 = vmatpush.msra.mxu0 %v208
        %232 = vmatpush.msra.mxu0 %v207
        %233 = vmatpush.msra.mxu0 %v206
        %234 = vmatmul.f32.gmra.mxu0 %v216
        %v235 = vpop.f32.mrf.mxu0
        %v236 = vadd.f32 %v212, %v235
        %237 = vdwg.mxu0
        %v238 = vadd.f32 %v205, %v236
        %239 = vst.msk [vmem:[%s204] sm:$0xff] %vm214, %v238
        %s240 = sand.u32 %s97, 1
        %s241 = scalar_lea.sflag [#allocation4], %s240
        %s242 = sand.u32 %s97, 1
        %s243 = smul.addr %s242, 8
        %s244 = scalar_lea.vmem [#allocation7], %s243
        // Predicated region
        $region41: #{tpu_custom_call.1} parent=31 // pred_check
          %p245 = pneg %p107
        $region42: #{tpu_custom_call.1} parent=31 // pred_check_branch
          %247 = sbr.rel (%p245) target = $region44
        $region43: #{tpu_custom_call.1} parent=31 // pred_region
          %249 = vsyncadd %s241, 0
          %s250 = smul.addr %s21, 8
          %s251 = scalar_lea.hbm %s3, %s250
          %s253 = sshll.u32 %s244, 4
          %s254 = int_to_ptr.vmem [resolvable:$true] %s253
          %s255 = sshll.u32 %s251, 4
          %s256 = int_to_ptr.hbm [resolvable:$true] %s255
          %258 = dma.vmem_to_hbm [thread:$0]  %s254, 128, %s256, %s241
        $region44: #{tpu_custom_call.1} parent=31 // pred_fallthru
          _
      $region32: #{tpu_custom_call.1} parent=5 // pred_fallthru
        _
      %p259 = scmp.le.s32.totalorder 2, %s16
      // Predicated region
      $region45: #{tpu_custom_call.1} parent=5 // pred_check
        %p260 = pneg %p259
      $region46: #{tpu_custom_call.1} parent=5 // pred_check_branch
        %262 = sbr.rel (%p260) target = $region48
      $region47: #{tpu_custom_call.1} parent=5 // pred_region
        %s263 = ssub.s32 %s16, 2
        // Predicated region
        $region49: #{tpu_custom_call.1} parent=47 // pred_check
          %p264 = pneg %p113
        $region50: #{tpu_custom_call.1} parent=47 // pred_check_branch
          %266 = sbr.rel (%p264) target = $region52
        $region51: #{tpu_custom_call.1} parent=47 // pred_region
          %s267 = sand.u32 %s98, 1
          %s268 = scalar_lea.sflag [#allocation4], %s267
          %s269 = sand.u32 %s98, 1
          %s270 = smul.addr %s269, 8
          %s271 = scalar_lea.vmem [#allocation7], %s270
          %273 = dma.done %s268, 128
        $region52: #{tpu_custom_call.1} parent=47 // pred_fallthru
          _
      $region48: #{tpu_custom_call.1} parent=5 // pred_fallthru
        _
    $region6: #{tpu_custom_call.1} parent=1 // loop_footer
      %s20 = sadd.s32 1, %s16
    $region7: #{tpu_custom_call.1} parent=1 // loop_footer_branch
      %15 = sbr.rel target = $region3
    $region8: #{tpu_custom_call.1} parent=1 // loop_exit
      _
    %274 = vsyncpa [#allocation3], 1
    %s275 = scalar_lea.sflag [#allocation3], 1
    %276 = vsyncpa %s275, 1
    %277 = vsyncpa [#allocation6], 1
    %278 = vsyncpa [#allocation4], 1
    %s279 = scalar_lea.sflag [#allocation4], 1
    %280 = vsyncpa %s279, 1

</llo_original>
